<compile_context>
chip_gen: v7x
topology: tpu7x:2x2x1
jax: 0.10.0
libtpu: 0.0.40
codegen_flags: <defaults>
</compile_context>

<pallas_src>
import jax
import jax.numpy as jnp
from jax.experimental import pallas as pl
from jax.experimental.pallas import tpu as pltpu


def _norm_reg_l1_kernel(ind_ref, feat_ref, mask_ref, target_ref, out_ref,
                        pred_buf):
    b = pl.program_id(0)
    K, C = pred_buf.shape  # static

    # In-VMEM gather: pred_buf[k, :] = feat[b, ind[b, k], :] for all k.
    # Each read is a dynamic sublane slice of the (HW, C) slab already in VMEM.
    for k in range(K):
        idx = ind_ref[b, k]                              # SMEM scalar read
        pred_buf[pl.ds(k, 1), :] = feat_ref[pl.ds(idx, 1), :]

    pred = pred_buf[...]                                 # (K, C) f32
    tgt = target_ref[...]                                # (K, C) f32
    m = mask_ref[...]                                    # (K, 1) f32

    pred = pred / (tgt + 1e-4)
    diff = jnp.abs(pred * m - m)                         # |pred*mask - 1*mask|

    num = jnp.sum(diff, keepdims=True)                   # (1, 1) numerator partial
    msum = jnp.sum(m, keepdims=True)                     # (1, 1) mask-sum partial

    # Lane-dense (2, 128) store: row 0 = numerator, row 1 = mask sum.
    row = jax.lax.broadcasted_iota(jnp.int32, out_ref.shape, 0)
    out_ref[...] = jnp.where(row == 0, num, msum)


def norm_reg_l1_loss(output, mask, ind, target):
    """output: (B,C,H,W) f32; mask: (B,K) 0/1; ind: (B,K) int; target: (B,K,C) f32."""
    B, C, H, W = output.shape
    K = ind.shape[1]
    HW = H * W

    # NHWC view (same permute as PyTorch _transpose_and_gather_feat): gather axis
    # becomes the sublane axis of the VMEM slab.
    feat = jnp.transpose(output.astype(jnp.float32), (0, 2, 3, 1)).reshape(B, HW, C)
    target_f = target.astype(jnp.float32)                 # (B, K, C): already kernel layout
    mask_f = mask.astype(jnp.float32).reshape(B, K, 1)
    ind_i = ind.astype(jnp.int32)

    # VMEM sizing: the slab block is double-buffered and its lane dim pads to 128.
    padded_c = max(((C + 127) // 128) * 128, 128)
    padded_hw = ((HW + 7) // 8) * 8
    slab_bytes = 2 * padded_hw * padded_c * 4             # double-buffered feat[b]
    vmem_limit = int(min(max(slab_bytes + (4 << 20), 32 << 20), 48 << 20))

    grid_spec = pltpu.PrefetchScalarGridSpec(
        num_scalar_prefetch=1,                             # `ind` -> SMEM
        grid=(B,),
        in_specs=[
            pl.BlockSpec((None, HW, C), lambda b, ind_ref: (b, 0, 0)),  # feat slab
            pl.BlockSpec((None, K, 1), lambda b, ind_ref: (b, 0, 0)),   # mask
            pl.BlockSpec((None, K, C), lambda b, ind_ref: (b, 0, 0)),   # target
        ],
        out_specs=pl.BlockSpec((None, 2, 128), lambda b, ind_ref: (b, 0, 0)),
        scratch_shapes=[
            pltpu.VMEM((K, C), jnp.float32),               # gathered pred
        ],
    )

    parts = pl.pallas_call(
        _norm_reg_l1_kernel,
        out_shape=jax.ShapeDtypeStruct((B, 2, 128), jnp.float32),
        grid_spec=grid_spec,
        compiler_params=pltpu.CompilerParams(
            dimension_semantics=("parallel",),             # v7x: shard B over 2 TCs
            vmem_limit_bytes=vmem_limit,
        ),
    )(ind_i, feat, mask_f, target_f)

    num = jnp.sum(parts[:, 0, 0])                          # tiny B-length reduces
    msum = jnp.sum(parts[:, 1, 0])
    den = jnp.float32(C) * msum + 1e-4                     # sum of the expanded mask
    return num / den


def _reference(output, mask, ind, target):
    B, C, H, W = output.shape
    feat = jnp.transpose(output, (0, 2, 3, 1)).reshape(B, H * W, C)
    pred = jnp.take_along_axis(feat, ind[:, :, None].astype(jnp.int32), axis=1)
    maskf = jnp.broadcast_to(mask[:, :, None].astype(jnp.float32), pred.shape)
    pred = pred / (target + 1e-4)
    num = jnp.sum(jnp.abs(pred * maskf - maskf))
    return num / (jnp.sum(maskf) + 1e-4)


if __name__ == "__main__":
    key = jax.random.PRNGKey(0)
    B, C, H, W, K = 2, 4, 16, 16, 8
    k1, k2, k3, k4 = jax.random.split(key, 4)

    output = jax.random.normal(k1, (B, C, H, W), dtype=jnp.float32)
    ind = jax.random.randint(k2, (B, K), 0, H * W, dtype=jnp.int32)
    mask = (jax.random.uniform(k3, (B, K)) > 0.3).astype(jnp.float32)
    target = jax.random.uniform(k4, (B, K, C), minval=0.5, maxval=1.5,
                                dtype=jnp.float32)

    loss = norm_reg_l1_loss(output, mask, ind, target)
    jax.block_until_ready(loss)

    ref = _reference(output, mask, ind, target)
    assert jnp.allclose(loss, ref, rtol=1e-5, atol=1e-5), (loss, ref)

    print("KERNEL_OK")
</pallas_src>

<mosaic_0001>
module attributes {stable_mosaic.version = 11 : i64} {
  func.func @_norm_reg_l1_kernel(%arg0: i32, %arg1: memref<2x8xi32, #tpu.memory_space<smem>>, %arg2: memref<1x256x4xf32, #tpu.memory_space<vmem>>, %arg3: memref<1x8x1xf32, #tpu.memory_space<vmem>>, %arg4: memref<1x8x4xf32, #tpu.memory_space<vmem>>, %arg5: memref<1x2x128xf32, #tpu.memory_space<vmem>>, %arg6: memref<8x4xf32, #tpu.memory_space<vmem>>) attributes {dimension_semantics = [#tpu.dimension_semantics<parallel>], iteration_bounds = array<i64: 2>, scalar_prefetch = 1 : i64, scratch_operands = 1 : i64, tpu.core_type = #tpu.core_type<tc>, window_params = [{transform_indices = @transform_0, window_bounds = array<i64: 1, 256, 4>}, {transform_indices = @transform_1, window_bounds = array<i64: 1, 8, 1>}, {transform_indices = @transform_2, window_bounds = array<i64: 1, 8, 4>}, {transform_indices = @transform_3, window_bounds = array<i64: 1, 2, 128>}]} {
    %0 = arith.index_cast %arg0 : i32 to index
    %c0 = arith.constant 0 : index
    %1 = memref.load %arg1[%0, %c0] : memref<2x8xi32, #tpu.memory_space<smem>>
    %c0_0 = arith.constant 0 : index
    %2 = arith.index_cast %1 : i32 to index
    %c0_1 = arith.constant 0 : index
    %3 = vector.load %arg2[%c0_0, %2, %c0_1] : memref<1x256x4xf32, #tpu.memory_space<vmem>>, vector<1x1x4xf32>
    %4 = vector.shape_cast %3 : vector<1x1x4xf32> to vector<1x4xf32>
    %c0_2 = arith.constant 0 : index
    %c0_3 = arith.constant 0 : index
    %5 = vector.load %arg6[%c0_2, %c0_3] : memref<8x4xf32, #tpu.memory_space<vmem>>, vector<1x4xf32>
    tpu.vector_store %arg6[%c0_2, %c0_3], %4 {strides = array<i32>} : memref<8x4xf32, #tpu.memory_space<vmem>>, vector<1x4xf32>,
    %6 = arith.index_cast %arg0 : i32 to index
    %c1 = arith.constant 1 : index
    %7 = memref.load %arg1[%6, %c1] : memref<2x8xi32, #tpu.memory_space<smem>>
    %c0_4 = arith.constant 0 : index
    %8 = arith.index_cast %7 : i32 to index
    %c0_5 = arith.constant 0 : index
    %9 = vector.load %arg2[%c0_4, %8, %c0_5] : memref<1x256x4xf32, #tpu.memory_space<vmem>>, vector<1x1x4xf32>
    %10 = vector.shape_cast %9 : vector<1x1x4xf32> to vector<1x4xf32>
    %c1_6 = arith.constant 1 : index
    %c0_7 = arith.constant 0 : index
    %11 = vector.load %arg6[%c1_6, %c0_7] : memref<8x4xf32, #tpu.memory_space<vmem>>, vector<1x4xf32>
    tpu.vector_store %arg6[%c1_6, %c0_7], %10 {strides = array<i32>} : memref<8x4xf32, #tpu.memory_space<vmem>>, vector<1x4xf32>,
    %12 = arith.index_cast %arg0 : i32 to index
    %c2 = arith.constant 2 : index
    %13 = memref.load %arg1[%12, %c2] : memref<2x8xi32, #tpu.memory_space<smem>>
    %c0_8 = arith.constant 0 : index
    %14 = arith.index_cast %13 : i32 to index
    %c0_9 = arith.constant 0 : index
    %15 = vector.load %arg2[%c0_8, %14, %c0_9] : memref<1x256x4xf32, #tpu.memory_space<vmem>>, vector<1x1x4xf32>
    %16 = vector.shape_cast %15 : vector<1x1x4xf32> to vector<1x4xf32>
    %c2_10 = arith.constant 2 : index
    %c0_11 = arith.constant 0 : index
    %17 = vector.load %arg6[%c2_10, %c0_11] : memref<8x4xf32, #tpu.memory_space<vmem>>, vector<1x4xf32>
    tpu.vector_store %arg6[%c2_10, %c0_11], %16 {strides = array<i32>} : memref<8x4xf32, #tpu.memory_space<vmem>>, vector<1x4xf32>,
    %18 = arith.index_cast %arg0 : i32 to index
    %c3 = arith.constant 3 : index
    %19 = memref.load %arg1[%18, %c3] : memref<2x8xi32, #tpu.memory_space<smem>>
    %c0_12 = arith.constant 0 : index
    %20 = arith.index_cast %19 : i32 to index
    %c0_13 = arith.constant 0 : index
    %21 = vector.load %arg2[%c0_12, %20, %c0_13] : memref<1x256x4xf32, #tpu.memory_space<vmem>>, vector<1x1x4xf32>
    %22 = vector.shape_cast %21 : vector<1x1x4xf32> to vector<1x4xf32>
    %c3_14 = arith.constant 3 : index
    %c0_15 = arith.constant 0 : index
    %23 = vector.load %arg6[%c3_14, %c0_15] : memref<8x4xf32, #tpu.memory_space<vmem>>, vector<1x4xf32>
    tpu.vector_store %arg6[%c3_14, %c0_15], %22 {strides = array<i32>} : memref<8x4xf32, #tpu.memory_space<vmem>>, vector<1x4xf32>,
    %24 = arith.index_cast %arg0 : i32 to index
    %c4 = arith.constant 4 : index
    %25 = memref.load %arg1[%24, %c4] : memref<2x8xi32, #tpu.memory_space<smem>>
    %c0_16 = arith.constant 0 : index
    %26 = arith.index_cast %25 : i32 to index
    %c0_17 = arith.constant 0 : index
    %27 = vector.load %arg2[%c0_16, %26, %c0_17] : memref<1x256x4xf32, #tpu.memory_space<vmem>>, vector<1x1x4xf32>
    %28 = vector.shape_cast %27 : vector<1x1x4xf32> to vector<1x4xf32>
    %c4_18 = arith.constant 4 : index
    %c0_19 = arith.constant 0 : index
    %29 = vector.load %arg6[%c4_18, %c0_19] : memref<8x4xf32, #tpu.memory_space<vmem>>, vector<1x4xf32>
    tpu.vector_store %arg6[%c4_18, %c0_19], %28 {strides = array<i32>} : memref<8x4xf32, #tpu.memory_space<vmem>>, vector<1x4xf32>,
    %30 = arith.index_cast %arg0 : i32 to index
    %c5 = arith.constant 5 : index
    %31 = memref.load %arg1[%30, %c5] : memref<2x8xi32, #tpu.memory_space<smem>>
    %c0_20 = arith.constant 0 : index
    %32 = arith.index_cast %31 : i32 to index
    %c0_21 = arith.constant 0 : index
    %33 = vector.load %arg2[%c0_20, %32, %c0_21] : memref<1x256x4xf32, #tpu.memory_space<vmem>>, vector<1x1x4xf32>
    %34 = vector.shape_cast %33 : vector<1x1x4xf32> to vector<1x4xf32>
    %c5_22 = arith.constant 5 : index
    %c0_23 = arith.constant 0 : index
    %35 = vector.load %arg6[%c5_22, %c0_23] : memref<8x4xf32, #tpu.memory_space<vmem>>, vector<1x4xf32>
    tpu.vector_store %arg6[%c5_22, %c0_23], %34 {strides = array<i32>} : memref<8x4xf32, #tpu.memory_space<vmem>>, vector<1x4xf32>,
    %36 = arith.index_cast %arg0 : i32 to index
    %c6 = arith.constant 6 : index
    %37 = memref.load %arg1[%36, %c6] : memref<2x8xi32, #tpu.memory_space<smem>>
    %c0_24 = arith.constant 0 : index
    %38 = arith.index_cast %37 : i32 to index
    %c0_25 = arith.constant 0 : index
    %39 = vector.load %arg2[%c0_24, %38, %c0_25] : memref<1x256x4xf32, #tpu.memory_space<vmem>>, vector<1x1x4xf32>
    %40 = vector.shape_cast %39 : vector<1x1x4xf32> to vector<1x4xf32>
    %c6_26 = arith.constant 6 : index
    %c0_27 = arith.constant 0 : index
    %41 = vector.load %arg6[%c6_26, %c0_27] : memref<8x4xf32, #tpu.memory_space<vmem>>, vector<1x4xf32>
    tpu.vector_store %arg6[%c6_26, %c0_27], %40 {strides = array<i32>} : memref<8x4xf32, #tpu.memory_space<vmem>>, vector<1x4xf32>,
    %42 = arith.index_cast %arg0 : i32 to index
    %c7 = arith.constant 7 : index
    %43 = memref.load %arg1[%42, %c7] : memref<2x8xi32, #tpu.memory_space<smem>>
    %c0_28 = arith.constant 0 : index
    %44 = arith.index_cast %43 : i32 to index
    %c0_29 = arith.constant 0 : index
    %45 = vector.load %arg2[%c0_28, %44, %c0_29] : memref<1x256x4xf32, #tpu.memory_space<vmem>>, vector<1x1x4xf32>
    %46 = vector.shape_cast %45 : vector<1x1x4xf32> to vector<1x4xf32>
    %c7_30 = arith.constant 7 : index
    %c0_31 = arith.constant 0 : index
    %47 = vector.load %arg6[%c7_30, %c0_31] : memref<8x4xf32, #tpu.memory_space<vmem>>, vector<1x4xf32>
    tpu.vector_store %arg6[%c7_30, %c0_31], %46 {strides = array<i32>} : memref<8x4xf32, #tpu.memory_space<vmem>>, vector<1x4xf32>,
    %c0_32 = arith.constant 0 : index
    %c0_33 = arith.constant 0 : index
    %48 = vector.load %arg6[%c0_32, %c0_33] : memref<8x4xf32, #tpu.memory_space<vmem>>, vector<8x4xf32>
    %c0_34 = arith.constant 0 : index
    %c0_35 = arith.constant 0 : index
    %c0_36 = arith.constant 0 : index
    %49 = vector.load %arg4[%c0_34, %c0_35, %c0_36] : memref<1x8x4xf32, #tpu.memory_space<vmem>>, vector<1x8x4xf32>
    %50 = vector.shape_cast %49 : vector<1x8x4xf32> to vector<8x4xf32>
    %c0_37 = arith.constant 0 : index
    %c0_38 = arith.constant 0 : index
    %c0_39 = arith.constant 0 : index
    %51 = vector.load %arg3[%c0_37, %c0_38, %c0_39] : memref<1x8x1xf32, #tpu.memory_space<vmem>>, vector<1x8x1xf32>
    %52 = vector.shape_cast %51 : vector<1x8x1xf32> to vector<8x1xf32>
    %cst = arith.constant 9.99999974E-5 : f32
    %53 = vector.broadcast %cst : f32 to vector<8x4xf32>
    %54 = arith.addf %50, %53 : vector<8x4xf32>
    %55 = arith.divf %48, %54 : vector<8x4xf32>
    %56 = vector.broadcast %52 : vector<8x1xf32> to vector<8x4xf32>
    %57 = arith.mulf %55, %56 : vector<8x4xf32>
    %58 = vector.broadcast %52 : vector<8x1xf32> to vector<8x4xf32>
    %59 = arith.subf %57, %58 : vector<8x4xf32>
    %60 = math.absf %59 : vector<8x4xf32>
    %61 = vector.shape_cast %60 : vector<8x4xf32> to vector<1x8x4xf32>
    %cst_40 = arith.constant dense<0.000000e+00> : vector<1xf32>
    %62 = vector.multi_reduction <add>, %61, %cst_40 [1, 2] : vector<1x8x4xf32> to vector<1xf32>
    %63 = vector.shape_cast %62 : vector<1xf32> to vector<1x1x1xf32>
    %64 = vector.extract %63[0, 0, 0] : f32 from vector<1x1x1xf32>
    %65 = vector.broadcast %64 : f32 to vector<1x1xf32>
    %66 = vector.shape_cast %52 : vector<8x1xf32> to vector<1x8x1xf32>
    %cst_41 = arith.constant dense<0.000000e+00> : vector<1xf32>
    %67 = vector.multi_reduction <add>, %66, %cst_41 [1, 2] : vector<1x8x1xf32> to vector<1xf32>
    %68 = vector.shape_cast %67 : vector<1xf32> to vector<1x1x1xf32>
    %69 = vector.extract %68[0, 0, 0] : f32 from vector<1x1x1xf32>
    %70 = vector.broadcast %69 : f32 to vector<1x1xf32>
    %71 = tpu.iota {dimensions = array<i32: 0>} : vector<2x128xi32>
    %c0_i32 = arith.constant 0 : i32
    %72 = vector.broadcast %c0_i32 : i32 to vector<2x128xi32>
    %73 = arith.cmpi eq, %71, %72 : vector<2x128xi32>
    %74 = vector.shape_cast %65 : vector<1x1xf32> to vector<1x1xf32>
    %75 = vector.broadcast %74 : vector<1x1xf32> to vector<2x128xf32>
    %76 = vector.shape_cast %70 : vector<1x1xf32> to vector<1x1xf32>
    %77 = vector.broadcast %76 : vector<1x1xf32> to vector<2x128xf32>
    %78 = arith.select %73, %75, %77 : vector<2x128xi1>, vector<2x128xf32>
    %c0_42 = arith.constant 0 : index
    %c0_43 = arith.constant 0 : index
    %c0_44 = arith.constant 0 : index
    %79 = vector.load %arg5[%c0_42, %c0_43, %c0_44] : memref<1x2x128xf32, #tpu.memory_space<vmem>>, vector<1x2x128xf32>
    %80 = vector.shape_cast %79 : vector<1x2x128xf32> to vector<2x128xf32>
    %81 = vector.shape_cast %78 : vector<2x128xf32> to vector<1x2x128xf32>
    tpu.vector_store %arg5[%c0_42, %c0_43, %c0_44], %81 {strides = array<i32>} : memref<1x2x128xf32, #tpu.memory_space<vmem>>, vector<1x2x128xf32>,
    return
  }
  func.func @transform_0(%arg0: i32, %arg1: memref<2x8xi32, #tpu.memory_space<smem>>) -> (i32, i32, i32) {
    %c0_i32 = arith.constant 0 : i32
    %c0_i32_0 = arith.constant 0 : i32
    %c0_i32_1 = arith.constant 0 : i32
    return %arg0, %c0_i32, %c0_i32_0 : i32, i32, i32
  }
  func.func @transform_1(%arg0: i32, %arg1: memref<2x8xi32, #tpu.memory_space<smem>>) -> (i32, i32, i32) {
    %c0_i32 = arith.constant 0 : i32
    %c0_i32_0 = arith.constant 0 : i32
    %c0_i32_1 = arith.constant 0 : i32
    return %arg0, %c0_i32, %c0_i32_0 : i32, i32, i32
  }
  func.func @transform_2(%arg0: i32, %arg1: memref<2x8xi32, #tpu.memory_space<smem>>) -> (i32, i32, i32) {
    %c0_i32 = arith.constant 0 : i32
    %c0_i32_0 = arith.constant 0 : i32
    %c0_i32_1 = arith.constant 0 : i32
    return %arg0, %c0_i32, %c0_i32_0 : i32, i32, i32
  }
  func.func @transform_3(%arg0: i32, %arg1: memref<2x8xi32, #tpu.memory_space<smem>>) -> (i32, i32, i32) {
    %c0_i32 = arith.constant 0 : i32
    %c0_i32_0 = arith.constant 0 : i32
    %c0_i32_1 = arith.constant 0 : i32
    return %arg0, %c0_i32, %c0_i32_0 : i32, i32, i32
  }
}

</mosaic_0001>

<llo_original>
// kernel: tpu_custom_call.1
$region0: #{tpu_custom_call.1}
  #allocation0 [shape = 'u32[]', space=smem, size = 0x4, offset = 0x4, fixed_abs, tag = 'smem constant byte address 0x4 - core index']
  #allocation1 [shape = 'u32[144,128]{1,0:T(1,128)}', space=vmem, size = 0x12000, scoped, tag = 'internal scratch']
  #allocation2 [shape = 'f32[8,4]{1,0:T(8,128)}', space=vmem, size = 0x1000, scoped, tag = 'scratch operand']
  #allocation3 [shape = 's32[1]{0}', space=sflag, size = 0x4, scoped, tag = 'scoped memory for tpu_custom_call.1']
  #allocation4 [shape = 'u8[1024]{0}', space=smem, size = 0x400, scoped, tag = 'prefetched SMEM operand 0']
  %s0 = inlined_call_operand.vmem [shape: s32[2,8], index: 0, kind: input, shape index: {}]
  %s1 = inlined_call_operand.vmem [shape: f32[2,256,4], index: 1, kind: input, shape index: {}]
  %s2 = inlined_call_operand.vmem [shape: f32[2,8,1], index: 2, kind: input, shape index: {}]
  %s3 = inlined_call_operand.vmem [shape: f32[2,8,4], index: 3, kind: input, shape index: {}]
  %s4 = inlined_call_operand.hbm [shape: f32[2,2,128], index: 4, kind: output, shape index: {}]
  %s5 = sld [smem:[#allocation0]]
  $region45: #{tpu_custom_call.1} parent=0
    _
  %s7 = ssub.s32 1, %s5
  %s8 = scalar_select 0, %s7, %s5
  %s9 = sshll.u32 %s0, 4
  %s10 = int_to_ptr.vmem [resolvable:$true] %s9
  %12 = dma.vmem_to_smem %s10, 32, [#allocation4], [#allocation3]
  %13 = dma.done [#allocation3], 32
  %14 = sfence
  $region1: #{tpu_custom_call.1} parent=0
    #allocation5 [shape = 'u8[2048]{0}', space=vmem, size = 0x800, scoped, tag = 'output window, operand 0']
    #allocation6 [shape = 's32[2]{0}', space=sflag, size = 0x8, scoped, tag = 'scoped memory for tpu_custom_call.1']
    %15 = vsyncpa [#allocation6], 0
    %s16 = scalar_lea.sflag [#allocation6], 1
    %17 = vsyncpa %s16, 0
    loop: start=0, step=1, limit=4
    $region2: #{tpu_custom_call.1} parent=1 // loop_pre_header
      _
    $region3: #{tpu_custom_call.1} parent=1 // loop_header
      %s19 = sphi 0, %s23
      %p20 = scmp.ge.s32.totalorder %s19, 4
      %s29 = sphi 0, %s31
      %s32 = sphi 0, %s29
      %s33 = sphi 0, %s32
      %s49 = sphi 0, %s33
      %s55 = sphi 0, %s57
      %s58 = sphi 0, %s55
      %s59 = sphi 0, %s58
      %s75 = sphi 0, %s59
      %s81 = sphi 0, %s83
      %s84 = sphi 0, %s81
      %s85 = sphi 0, %s84
      %s101 = sphi 0, %s85
      %s107 = sphi 0, %s109
      %s110 = sphi 0, %s107
      %s111 = sphi 0, %s110
      %s127 = sphi 0, %s111
    $region4: #{tpu_custom_call.1} parent=1 // loop_header_branch
      %22 = sbr.rel (%p20) target = $region8
    $region5: #{tpu_custom_call.1} parent=1 // loop_body
      %s24 = ssub.s32 %s19, 1
      %s25 = ssub.s32 %s19, 2
      %s26 = sadd.s32 %s19, 1
      %s27 = ssub.s32 %s19, %s26
      %p28 = scmp.eq.s32.totalorder %s27, 0
      %s30 = sadd.s32 %s29, 1
      %s31 = scalar_select %p28, %s29, %s30
      %p34 = pneg %p28
      %p35 = scmp.eq.s32.totalorder %s19, 1
      %p36 = por %p34, %p35
      %p37 = scmp.ne.s32.totalorder %s29, %s32
      %p38 = scmp.eq.s32.totalorder %s19, 0
      %p39 = por %p37, %p38
      %p40 = scmp.ne.s32.totalorder %s29, %s32
      %p41 = scmp.eq.s32.totalorder %s24, 1
      %p42 = por %p40, %p41
      %p43 = scmp.ne.s32.totalorder %s32, %s33
      %p44 = scmp.eq.s32.totalorder %s24, 0
      %p45 = por %p43, %p44
      %p46 = scmp.ne.s32.totalorder %s32, %s33
      %p47 = scmp.eq.s32.totalorder %s25, 1
      %p48 = por %p46, %p47
      %p50 = scmp.ne.s32.totalorder %s33, %s49
      %p51 = scmp.eq.s32.totalorder %s25, 0
      %p52 = por %p50, %p51
      %s53 = ssub.s32 %s19, %s26
      %p54 = scmp.eq.s32.totalorder %s53, 0
      %s56 = sadd.s32 %s55, 1
      %s57 = scalar_select %p54, %s55, %s56
      %p60 = pneg %p54
      %p61 = scmp.eq.s32.totalorder %s19, 1
      %p62 = por %p60, %p61
      %p63 = scmp.ne.s32.totalorder %s55, %s58
      %p64 = scmp.eq.s32.totalorder %s19, 0
      %p65 = por %p63, %p64
      %p66 = scmp.ne.s32.totalorder %s55, %s58
      %p67 = scmp.eq.s32.totalorder %s24, 1
      %p68 = por %p66, %p67
      %p69 = scmp.ne.s32.totalorder %s58, %s59
      %p70 = scmp.eq.s32.totalorder %s24, 0
      %p71 = por %p69, %p70
      %p72 = scmp.ne.s32.totalorder %s58, %s59
      %p73 = scmp.eq.s32.totalorder %s25, 1
      %p74 = por %p72, %p73
      %p76 = scmp.ne.s32.totalorder %s59, %s75
      %p77 = scmp.eq.s32.totalorder %s25, 0
      %p78 = por %p76, %p77
      %s79 = ssub.s32 %s19, %s26
      %p80 = scmp.eq.s32.totalorder %s79, 0
      %s82 = sadd.s32 %s81, 1
      %s83 = scalar_select %p80, %s81, %s82
      %p86 = pneg %p80
      %p87 = scmp.eq.s32.totalorder %s19, 1
      %p88 = por %p86, %p87
      %p89 = scmp.ne.s32.totalorder %s81, %s84
      %p90 = scmp.eq.s32.totalorder %s19, 0
      %p91 = por %p89, %p90
      %p92 = scmp.ne.s32.totalorder %s81, %s84
      %p93 = scmp.eq.s32.totalorder %s24, 1
      %p94 = por %p92, %p93
      %p95 = scmp.ne.s32.totalorder %s84, %s85
      %p96 = scmp.eq.s32.totalorder %s24, 0
      %p97 = por %p95, %p96
      %p98 = scmp.ne.s32.totalorder %s84, %s85
      %p99 = scmp.eq.s32.totalorder %s25, 1
      %p100 = por %p98, %p99
      %p102 = scmp.ne.s32.totalorder %s85, %s101
      %p103 = scmp.eq.s32.totalorder %s25, 0
      %p104 = por %p102, %p103
      %s105 = ssub.s32 %s19, %s26
      %p106 = scmp.eq.s32.totalorder %s105, 0
      %s108 = sadd.s32 %s107, 1
      %s109 = scalar_select %p106, %s107, %s108
      %p112 = pneg %p106
      %p113 = scmp.eq.s32.totalorder %s19, 1
      %p114 = por %p112, %p113
      %p115 = scmp.ne.s32.totalorder %s107, %s110
      %p116 = scmp.eq.s32.totalorder %s19, 0
      %p117 = por %p115, %p116
      %p118 = scmp.ne.s32.totalorder %s107, %s110
      %p119 = scmp.eq.s32.totalorder %s24, 1
      %p120 = por %p118, %p119
      %p121 = scmp.ne.s32.totalorder %s110, %s111
      %p122 = scmp.eq.s32.totalorder %s24, 0
      %p123 = por %p121, %p122
      %p124 = scmp.ne.s32.totalorder %s110, %s111
      %p125 = scmp.eq.s32.totalorder %s25, 1
      %p126 = por %p124, %p125
      %p128 = scmp.ne.s32.totalorder %s111, %s127
      %p129 = scmp.eq.s32.totalorder %s25, 0
      %p130 = por %p128, %p129
      %p131 = scmp.le.s32.totalorder 1, %s19
      %p132 = scmp.lt.s32.totalorder %s19, 3
      %p133 = pnand %p131, %p132
      %p134 = pneg %p133
      // Predicated region
      $region9: #{tpu_custom_call.1} parent=5 // pred_check
        _
      $region10: #{tpu_custom_call.1} parent=5 // pred_check_branch
        %136 = sbr.rel (%p133) target = $region12
      $region11: #{tpu_custom_call.1} parent=5 // pred_region
        %s137 = ssub.s32 %s19, 1
      $region12: #{tpu_custom_call.1} parent=5 // pred_fallthru
        _
      %p138 = scmp.lt.s32.totalorder %s19, 2
      // Predicated region
      $region13: #{tpu_custom_call.1} parent=5 // pred_check
        %p139 = pneg %p138
      $region14: #{tpu_custom_call.1} parent=5 // pred_check_branch
        %141 = sbr.rel (%p139) target = $region16
      $region15: #{tpu_custom_call.1} parent=5 // pred_region
        // Predicated region
        $region17: #{tpu_custom_call.1} parent=15 // pred_check
          %p142 = pneg %p39
        $region18: #{tpu_custom_call.1} parent=15 // pred_check_branch
          %144 = sbr.rel (%p142) target = $region20
        $region19: #{tpu_custom_call.1} parent=15 // pred_region
          %p145 = scmp.lt.s32.totalorder %s19, 1
          %s146 = scalar_select %p145, %s19, 1
          %s147 = smul.addr %s146, 32
          %s148 = smul.addr %s147, 8
          %s149 = scalar_lea.vmem %s1, %s148
        $region20: #{tpu_custom_call.1} parent=15 // pred_fallthru
          _
        // Predicated region
        $region21: #{tpu_custom_call.1} parent=15 // pred_check
          %p150 = pneg %p65
        $region22: #{tpu_custom_call.1} parent=15 // pred_check_branch
          %152 = sbr.rel (%p150) target = $region24
        $region23: #{tpu_custom_call.1} parent=15 // pred_region
          %p153 = scmp.lt.s32.totalorder %s19, 1
          %s154 = scalar_select %p153, %s19, 1
          %s155 = smul.addr %s154, 8
          %s156 = scalar_lea.vmem %s2, %s155
        $region24: #{tpu_custom_call.1} parent=15 // pred_fallthru
          _
        // Predicated region
        $region25: #{tpu_custom_call.1} parent=15 // pred_check
          %p157 = pneg %p91
        $region26: #{tpu_custom_call.1} parent=15 // pred_check_branch
          %159 = sbr.rel (%p157) target = $region28
        $region27: #{tpu_custom_call.1} parent=15 // pred_region
          %p160 = scmp.lt.s32.totalorder %s19, 1
          %s161 = scalar_select %p160, %s19, 1
          %s162 = smul.addr %s161, 8
          %s163 = scalar_lea.vmem %s3, %s162
        $region28: #{tpu_custom_call.1} parent=15 // pred_fallthru
          _
      $region16: #{tpu_custom_call.1} parent=5 // pred_fallthru
        _
      %p164 = scmp.le.s32.totalorder 1, %s19
      %p165 = scmp.lt.s32.totalorder %s19, 3
      %p166 = pnand %p164, %p165
      %p167 = pneg %p166
      // Predicated region
      $region29: #{tpu_custom_call.1} parent=5 // pred_check
        _
      $region30: #{tpu_custom_call.1} parent=5 // pred_check_branch
        %169 = sbr.rel (%p166) target = $region32
      $region31: #{tpu_custom_call.1} parent=5 // pred_region
        %s170 = ssub.s32 %s19, 1
        %p171 = scmp.lt.s32.totalorder %s24, 1
        %s172 = scalar_select %p171, %s24, 1
        %s173 = smul.addr %s172, 32
        %s174 = smul.addr %s173, 8
        %s175 = scalar_lea.vmem %s1, %s174
        %p176 = pneg %p45
        %p177 = pneg %p42
        %p178 = scmp.lt.s32.totalorder %s24, 1
        %s179 = scalar_select %p178, %s24, 1
        %s180 = smul.addr %s179, 8
        %s181 = scalar_lea.vmem %s2, %s180
        %p182 = pneg %p71
        %p183 = pneg %p68
        %p184 = scmp.lt.s32.totalorder %s24, 1
        %s185 = scalar_select %p184, %s24, 1
        %s186 = smul.addr %s185, 8
        %s187 = scalar_lea.vmem %s3, %s186
        %p188 = pneg %p97
        %p189 = pneg %p94
        %p190 = pneg %p123
        %p191 = pneg %p120
        %s192 = sand.u32 %s110, 1
        %s193 = scalar_lea.sflag [#allocation6], %s192
        %s194 = sand.u32 %s110, 1
        %s195 = smul.addr %s194, 2
        %s196 = scalar_lea.vmem [#allocation5], %s195
        %p197 = scmp.lt.s32.totalorder %s24, 1
        %s198 = scalar_select %p197, %s24, 1
        %s199 = smul.addr %s198, 32
        %s200 = smul.addr %s199, 8
        %s201 = scalar_lea.vmem %s1, %s200
        %p202 = scmp.lt.s32.totalorder %s24, 1
        %s203 = scalar_select %p202, %s24, 1
        %s204 = smul.addr %s203, 8
        %s205 = scalar_lea.vmem %s2, %s204
        %p206 = scmp.lt.s32.totalorder %s24, 1
        %s207 = scalar_select %p206, %s24, 1
        %s208 = smul.addr %s207, 8
        %s209 = scalar_lea.vmem %s3, %s208
        %s210 = smul.u32 %s24, 128
        %s211 = sld [smem:[#allocation4 + %s210]]
        %s212 = scalar_lea.vmem %s201, %s211
        %v213 = vld [vmem:[%s212] sm:$0x1]
        %vm214 = vcmask 24576
        %215 = vst.msk [vmem:[#allocation2] sm:$0x1] %vm214, %v213
        %s216 = sadd.s32 %s210, 1
        %s217 = sld [smem:[#allocation4 + %s216]]
        %s218 = scalar_lea.vmem %s201, %s217
        %v219 = vld [vmem:[%s218] sm:$0x1]
        %220 = vst.msk [vmem:[#allocation2 + $0x1] sm:$0x1] %vm214, %v219
        %s221 = sadd.s32 %s210, 2
        %s222 = sld [smem:[#allocation4 + %s221]]
        %s223 = scalar_lea.vmem %s201, %s222
        %v224 = vld [vmem:[%s223] sm:$0x1]
        %225 = vst.msk [vmem:[#allocation2 + $0x2] sm:$0x1] %vm214, %v224
        %s226 = sadd.s32 %s210, 3
        %s227 = sld [smem:[#allocation4 + %s226]]
        %s228 = scalar_lea.vmem %s201, %s227
        %v229 = vld [vmem:[%s228] sm:$0x1]
        %230 = vst.msk [vmem:[#allocation2 + $0x3] sm:$0x1] %vm214, %v229
        %s231 = sadd.s32 %s210, 4
        %s232 = sld [smem:[#allocation4 + %s231]]
        %s233 = scalar_lea.vmem %s201, %s232
        %v234 = vld [vmem:[%s233] sm:$0x1]
        %235 = vst.msk [vmem:[#allocation2 + $0x4] sm:$0x1] %vm214, %v234
        %s236 = sadd.s32 %s210, 5
        %s237 = sld [smem:[#allocation4 + %s236]]
        %s238 = scalar_lea.vmem %s201, %s237
        %v239 = vld [vmem:[%s238] sm:$0x1]
        %240 = vst.msk [vmem:[#allocation2 + $0x5] sm:$0x1] %vm214, %v239
        %s241 = sadd.s32 %s210, 6
        %s242 = sld [smem:[#allocation4 + %s241]]
        %s243 = scalar_lea.vmem %s201, %s242
        %v244 = vld [vmem:[%s243] sm:$0x1]
        %245 = vst.msk [vmem:[#allocation2 + $0x6] sm:$0x1] %vm214, %v244
        %s246 = sadd.s32 %s210, 7
        %s247 = sld [smem:[#allocation4 + %s246]]
        %s248 = scalar_lea.vmem %s201, %s247
        %v249 = vld [vmem:[%s248] sm:$0x1]
        %250 = vst.msk [vmem:[#allocation2 + $0x7] sm:$0x1] %vm214, %v249
        %v251 = vld [vmem:[#allocation2] sm:$0xff]
        %v252 = vld [vmem:[%s209] sm:$0xff]
        %v253 = vld [vmem:[%s205] sm:$0xff]
        %v254 = vadd.f32 %v252, 0.0001
        %v255 = vrcp.pop %v254
        %v256 = vmul.f32 %v251, %v255
        %258 = vset.pattern.permute.xlu0 0
        %259 = vperm.xlu0 %258, %v253
        %v260 = vpop.permute.xlu0 %259
        %v262 = vmul.f32 %v256, %v260
        %v263 = vsub.f32 %v262, %v260
        %v264 = vand.u32 2147483647, %v263
        %vm265 = vcmask 31744
        %v266 = vsel %vm265, %v264, 0.0
        %267 = vadd.xlane.f32.xlu0 %v266
        %v268 = vpop.xlane.xlu0 %267
        %v269 = vrot.slane %v268, 4
        %v270 = vadd.f32 %v268, %v269
        %v271 = vrot.slane %v270, 2
        %v272 = vadd.f32 %v270, %v271
        %v273 = vrot.slane %v272, 1
        %v274 = vadd.f32 %v272, %v273
        %s275 = vtos %v274
        %vm276 = vcmask 7168
        %v277 = vsel %vm276, %v253, 0.0
        %278 = vadd.xlane.f32.xlu0 %v277
        %v279 = vpop.xlane.xlu0 %278
        %v280 = vrot.slane %v279, 4
        %v281 = vadd.f32 %v279, %v280
        %v282 = vrot.slane %v281, 2
        %v283 = vadd.f32 %v281, %v282
        %v284 = vrot.slane %v283, 1
        %v285 = vadd.f32 %v283, %v284
        %s286 = vtos %v285
        %v287 = vlaneseq
        %v288 = vshrl.u32 %v287, 7
        %vm289 = vcmp.eq.s32.totalorder %v288, 0
        %v290 = vstv %s275
        %v291 = vstv %s286
        %v292 = vsel %vm289, %v290, %v291
        %293 = vst [vmem:[%s196] sm:$0x3] %v292
        %s294 = sand.u32 %s110, 1
        %s295 = scalar_lea.sflag [#allocation6], %s294
        %s296 = sand.u32 %s110, 1
        %s297 = smul.addr %s296, 2
        %s298 = scalar_lea.vmem [#allocation5], %s297
        // Predicated region
        $region33: #{tpu_custom_call.1} parent=31 // pred_check
          %p299 = pneg %p120
        $region34: #{tpu_custom_call.1} parent=31 // pred_check_branch
          %301 = sbr.rel (%p299) target = $region36
        $region35: #{tpu_custom_call.1} parent=31 // pred_region
          %s303 = ssub.s32 32, 32
          %304 = vsyncadd %s295, %s303
          %s305 = smul.addr %s24, 32
          %s306 = scalar_lea.hbm %s4, %s305
          %s308 = sshll.u32 %s298, 4
          %s309 = int_to_ptr.vmem [resolvable:$true] %s308
          %311 = dma.vmem_to_hbm [thread:$0]  %s309, 32, %s306, %s295
        $region36: #{tpu_custom_call.1} parent=31 // pred_fallthru
          _
      $region32: #{tpu_custom_call.1} parent=5 // pred_fallthru
        _
      %p312 = scmp.le.s32.totalorder 2, %s19
      // Predicated region
      $region37: #{tpu_custom_call.1} parent=5 // pred_check
        %p313 = pneg %p312
      $region38: #{tpu_custom_call.1} parent=5 // pred_check_branch
        %315 = sbr.rel (%p313) target = $region40
      $region39: #{tpu_custom_call.1} parent=5 // pred_region
        %s316 = ssub.s32 %s19, 2
        // Predicated region
        $region41: #{tpu_custom_call.1} parent=39 // pred_check
          %p317 = pneg %p126
        $region42: #{tpu_custom_call.1} parent=39 // pred_check_branch
          %319 = sbr.rel (%p317) target = $region44
        $region43: #{tpu_custom_call.1} parent=39 // pred_region
          %s320 = sand.u32 %s111, 1
          %s321 = scalar_lea.sflag [#allocation6], %s320
          %s322 = sand.u32 %s111, 1
          %s323 = smul.addr %s322, 2
          %s324 = scalar_lea.vmem [#allocation5], %s323
          %325 = dma.done %s321, 32
        $region44: #{tpu_custom_call.1} parent=39 // pred_fallthru
          _
      $region40: #{tpu_custom_call.1} parent=5 // pred_fallthru
        _
    $region6: #{tpu_custom_call.1} parent=1 // loop_footer
      %s23 = sadd.s32 1, %s19
    $region7: #{tpu_custom_call.1} parent=1 // loop_footer_branch
      %18 = sbr.rel target = $region3
    $region8: #{tpu_custom_call.1} parent=1 // loop_exit
      _
    %326 = vsyncpa [#allocation6], 1
    %s327 = scalar_lea.sflag [#allocation6], 1
    %328 = vsyncpa %s327, 1

</llo_original>
